<compile_context>
chip_gen: v5e
topology: v5e:2x2
jax: 0.10.0
libtpu: 0.0.40
codegen_flags: <defaults>
</compile_context>

<pallas_src>
from functools import partial

import jax
import jax.numpy as jnp
from jax.experimental import pallas as pl
from jax.experimental.pallas import tpu as pltpu


def _multispike_kernel(x_ref, o_ref, *, min_value, max_value, norm):
    x = x_ref[...]
    clamped = jnp.clip(x, min_value, max_value)
    # torch.round rounds half to even, same as jnp.round.
    o_ref[...] = (jnp.round(clamped) / norm).astype(o_ref.dtype)


def multispike(x, min_value=0, max_value=4, norm=None):
    """Pallas implementation of MultiSpike.forward for any-shaped float input."""
    if norm is None:
        norm = max_value

    orig_shape = x.shape
    orig_dtype = x.dtype
    n = x.size
    if n == 0:
        return x

    lane = 128
    itemsize = jnp.dtype(orig_dtype).itemsize
    # Packed-sublane multiple: f32 -> 8, bf16 -> 16, int8/fp8 -> 32.
    sub_mult = 8 * max(1, 4 // itemsize)

    # ~2 MiB per block (f32: 4096 rows, bf16: 8192 rows, int8: 16384 rows).
    target_block_bytes = 2 * 1024 * 1024
    max_block_rows = max(sub_mult, target_block_bytes // (lane * itemsize))
    max_block_rows = (max_block_rows // sub_mult) * sub_mult

    # Fast path: no pad/slice copies when the flat size is lane-aligned.
    pad = (-n) % lane
    x_flat = jnp.reshape(x, (n,))
    if pad:
        x_flat = jnp.pad(x_flat, (0, pad))
    rows = (n + pad) // lane
    x2d = jnp.reshape(x_flat, (rows, lane))

    if rows <= max_block_rows:
        # Small input: single block equal to the full array (always legal).
        block_rows = rows
    else:
        # Large input: fixed large block; edge block may be partial.
        block_rows = max_block_rows
    grid = (pl.cdiv(rows, block_rows),)

    kernel = partial(
        _multispike_kernel,
        min_value=float(min_value),
        max_value=float(max_value),
        norm=float(norm),
    )

    out2d = pl.pallas_call(
        kernel,
        out_shape=jax.ShapeDtypeStruct((rows, lane), orig_dtype),
        grid_spec=pltpu.PrefetchScalarGridSpec(
            num_scalar_prefetch=0,
            grid=grid,
            in_specs=[pl.BlockSpec((block_rows, lane), lambda i: (i, 0))],
            out_specs=pl.BlockSpec((block_rows, lane), lambda i: (i, 0)),
        ),
        compiler_params=pltpu.CompilerParams(
            dimension_semantics=("parallel",),
        ),
    )(x2d)

    if pad:
        out_flat = jnp.reshape(out2d, (rows * lane,))[:n]
    else:
        out_flat = jnp.reshape(out2d, (n,))
    return jnp.reshape(out_flat, orig_shape)


if __name__ == "__main__":
    key = jax.random.PRNGKey(0)
    # NCHW input; values spread outside [0, 4] to exercise the clamp.
    x = jax.random.normal(key, (2, 4, 16, 16), dtype=jnp.float32) * 3.0 + 1.0

    out = multispike(x, min_value=0, max_value=4, norm=None)
    out = jax.block_until_ready(out)

    # Reference check in plain JAX (same semantics as the torch module).
    ref = jnp.round(jnp.clip(x, 0.0, 4.0)) / 4.0
    assert out.shape == x.shape and out.dtype == x.dtype
    assert jnp.allclose(out, ref, atol=1e-6), "mismatch vs reference"

    print("KERNEL_OK")
</pallas_src>

<mosaic_0001>
module attributes {stable_mosaic.version = 11 : i64} {
  func.func @_multispike_kernel(%arg0: i32, %arg1: memref<16x128xf32, #tpu.memory_space<vmem>>, %arg2: memref<16x128xf32, #tpu.memory_space<vmem>>) attributes {dimension_semantics = [#tpu.dimension_semantics<parallel>], iteration_bounds = array<i64: 1>, scalar_prefetch = 0 : i64, scratch_operands = 0 : i64, tpu.core_type = #tpu.core_type<tc>, window_params = [{transform_indices = @transform_0, window_bounds = array<i64: 16, 128>}, {transform_indices = @transform_1, window_bounds = array<i64: 16, 128>}]} {
    %c0 = arith.constant 0 : index
    %c0_0 = arith.constant 0 : index
    %0 = vector.load %arg1[%c0, %c0_0] : memref<16x128xf32, #tpu.memory_space<vmem>>, vector<16x128xf32>
    %cst = arith.constant 0.000000e+00 : f32
    %cst_1 = arith.constant 4.000000e+00 : f32
    %1 = vector.broadcast %cst : f32 to vector<16x128xf32>
    %2 = arith.maximumf %1, %0 : vector<16x128xf32>
    %3 = vector.broadcast %cst_1 : f32 to vector<16x128xf32>
    %4 = arith.minimumf %3, %2 : vector<16x128xf32>
    %5 = math.roundeven %4 : vector<16x128xf32>
    %cst_2 = arith.constant 4.000000e+00 : f32
    %6 = vector.broadcast %cst_2 : f32 to vector<16x128xf32>
    %7 = arith.divf %5, %6 : vector<16x128xf32>
    %c0_3 = arith.constant 0 : index
    %c0_4 = arith.constant 0 : index
    %8 = vector.load %arg2[%c0_3, %c0_4] : memref<16x128xf32, #tpu.memory_space<vmem>>, vector<16x128xf32>
    tpu.vector_store %arg2[%c0_3, %c0_4], %7 {strides = array<i32>} : memref<16x128xf32, #tpu.memory_space<vmem>>, vector<16x128xf32>,
    return
  }
  func.func @transform_0(%arg0: i32) -> (i32, i32) {
    %c0_i32 = arith.constant 0 : i32
    %c0_i32_0 = arith.constant 0 : i32
    return %arg0, %c0_i32 : i32, i32
  }
  func.func @transform_1(%arg0: i32) -> (i32, i32) {
    %c0_i32 = arith.constant 0 : i32
    %c0_i32_0 = arith.constant 0 : i32
    return %arg0, %c0_i32 : i32, i32
  }
}

</mosaic_0001>

<llo_original>
// kernel: tpu_custom_call.1
$region0: #{tpu_custom_call.1}
  #allocation0 [shape = 'u32[]', space=smem, size = 0x4, offset = 0x4, fixed_abs, tag = 'smem constant byte address 0x4 - core index']
  #allocation1 [shape = 'u32[72,128]{1,0:T(1,128)}', space=vmem, size = 0x9000, scoped, tag = 'internal scratch']
  %s0 = inlined_call_operand.hbm [shape: f32[16,128], index: 0, kind: input, shape index: {}]
  %s1 = inlined_call_operand.hbm [shape: f32[16,128], index: 1, kind: output, shape index: {}]
  %s2 = sld [smem:[#allocation0]]
  $region18: #{tpu_custom_call.1} parent=0
    _
  %s4 = ssub.s32 1, %s2
  %s5 = scalar_select 0, %s4, %s2
  $region1: #{tpu_custom_call.1} parent=0
    #allocation2 [shape = 'u8[8192]{0}', space=vmem, size = 0x2000, scoped, tag = 'input window, operand 0, single buffered']
    #allocation3 [shape = 's32[1]{0}', space=sflag, size = 0x4, scoped, tag = 'scoped memory for tpu_custom_call.1']
    #allocation4 [shape = 's32[1]{0}', space=sflag, size = 0x4, scoped, tag = 'scoped memory for tpu_custom_call.1']
    #allocation5 [shape = 'u8[8192]{0}', space=vmem, size = 0x2000, scoped, tag = 'output window, operand 0, single buffered']
    %6 = vsyncpa [#allocation3], 0
    %7 = vsyncpa [#allocation4], 0
    // Predicated region
    $region2: #{tpu_custom_call.1} parent=1 // pred_check
      _
    $region3: #{tpu_custom_call.1} parent=1 // pred_check_branch
      %9 = sbr.rel (0) target = $region5
    $region4: #{tpu_custom_call.1} parent=1 // pred_region
      %11 = vsyncadd [#allocation3], 0
      %s12 = sshll.u32 %s0, 4
      %s13 = int_to_ptr.hbm [resolvable:$true] %s12
      %s14 = sshll.u32 [#allocation2], 4
      %s15 = int_to_ptr.vmem [resolvable:$true] %s14
      %20 = dma.hbm_to_vmem [thread:$0]  %s13, 256, %s15, [#allocation3], 128, 128, 8
    $region5: #{tpu_custom_call.1} parent=1 // pred_fallthru
      _
    // Predicated region
    $region6: #{tpu_custom_call.1} parent=1 // pred_check
      _
    $region7: #{tpu_custom_call.1} parent=1 // pred_check_branch
      %22 = sbr.rel (0) target = $region9
    $region8: #{tpu_custom_call.1} parent=1 // pred_region
      %24 = dma.done [#allocation3], 256
    $region9: #{tpu_custom_call.1} parent=1 // pred_fallthru
      _
    %v25 = vld [vmem:[#allocation2] sm:$0xff]
    %v26 = vld [vmem:[#allocation2 + $0x8] sm:$0xff]
    %v27 = vmax.f32 %v25, 0.0
    %v28 = vmax.f32 %v26, 0.0
    %v29 = vmin.f32 %v27, 4.0
    %v30 = vmin.f32 %v28, 4.0
    %v31 = vround.ne.pseudo %v29
    %v32 = vround.ne.pseudo %v30
    %v33 = vrcp.pop 4.0
    %v34 = vmul.f32 4.0, %v33
    %v35 = vsub.f32 1.0, %v34
    %v36 = vmul.f32 %v33, %v35
    %v37 = vadd.f32 %v33, %v36
    %vm38 = vweird.f32 %v33
    %v39 = vsel %vm38, %v33, %v37
    %v40 = vmul.f32 %v31, %v39
    %v41 = vmul.f32 %v32, %v39
    %42 = vst [vmem:[#allocation5] sm:$0xff] %v40
    %43 = vst [vmem:[#allocation5 + $0x8] sm:$0xff] %v41
    // Predicated region
    $region10: #{tpu_custom_call.1} parent=1 // pred_check
      _
    $region11: #{tpu_custom_call.1} parent=1 // pred_check_branch
      %45 = sbr.rel (0) target = $region13
    $region12: #{tpu_custom_call.1} parent=1 // pred_region
      %47 = vsyncadd [#allocation4], 0
      %s48 = sshll.u32 [#allocation5], 4
      %s49 = int_to_ptr.vmem [resolvable:$true] %s48
      %s50 = sshll.u32 %s1, 4
      %s51 = int_to_ptr.hbm [resolvable:$true] %s50
      %56 = dma.vmem_to_hbm [thread:$0]  %s49, 256, %s51, [#allocation4], 128, 128, 8
    $region13: #{tpu_custom_call.1} parent=1 // pred_fallthru
      _
    // Predicated region
    $region14: #{tpu_custom_call.1} parent=1 // pred_check
      _
    $region15: #{tpu_custom_call.1} parent=1 // pred_check_branch
      %58 = sbr.rel (0) target = $region17
    $region16: #{tpu_custom_call.1} parent=1 // pred_region
      %60 = dma.done [#allocation4], 256
    $region17: #{tpu_custom_call.1} parent=1 // pred_fallthru
      _
    %61 = vsyncpa [#allocation3], 1
    %62 = vsyncpa [#allocation4], 1

</llo_original>
